<compile_context>
chip_gen: v7x
topology: tpu7x:2x2x1
jax: 0.10.0
libtpu: 0.0.40
codegen_flags: <defaults>
</compile_context>

<pallas_src>
import math
import functools

import jax
import jax.numpy as jnp
from jax.experimental import pallas as pl
from jax.experimental.pallas import tpu as pltpu


# ----------------------------------------------------------------------------
# Kernel bodies
# ----------------------------------------------------------------------------
def _attention_core(q, k, v, wo_ref, out_ref, *, num_heads, bb, seq, inv_scale):
    """Shared attention body.

    q, k, v : (rows, N) float32 projections, rows = bb * seq.
    wo_ref  : (N, N) VMEM ref, pre-transposed to (in, out), compute dtype.
    out_ref : (rows, N) output tile.
    """
    rows, hidden = q.shape
    d = hidden // num_heads
    cdt = wo_ref.dtype  # matmul-operand dtype (bf16 by default, f32 optional)

    # Fold the softmax scale into q once (rows*N multiplies instead of
    # num_heads*bb*S^2), then cast the full-width tensors once (lane-aligned).
    q = (q * inv_scale).astype(cdt)
    k = k.astype(cdt)
    v = v.astype(cdt)

    wo = wo_ref[...]  # load the output-projection weight once

    # Output-projection accumulator kept in f32.  Accumulating each head's
    # contribution head_h @ Wo[h*d:(h+1)*d, :] removes the head-concat scratch
    # slab and its masked sub-128-lane stores; the only store in the kernel is
    # the final lane-dense (rows, N) one.
    acc = jnp.zeros((rows, hidden), jnp.float32)

    # num_heads is a compile-time constant; static loop is fine at this size.
    # TODO(synk): switch to lax.fori_loop for num_heads >= 8 / long S to bound
    #             live ranges of the per-head (bb, S, S) intermediates.
    for h in range(num_heads):
        sl = slice(h * d, (h + 1) * d)
        q_h = q[:, sl].reshape(bb, seq, d)
        k_h = k[:, sl].reshape(bb, seq, d)
        v_h = v[:, sl].reshape(bb, seq, d)

        # Batched scores over the block's batch dim; contraction on the head
        # dim d -> no per-head transpose is materialized.
        scores = jnp.einsum('bqd,bkd->bqk', q_h, k_h,
                            preferred_element_type=jnp.float32)

        # Softmax over the last axis, in f32 (valid_lens=None path).
        m = jnp.max(scores, axis=-1, keepdims=True)
        p = jnp.exp(scores - m)
        denom = jnp.sum(p, axis=-1, keepdims=True)
        attn = p * pl.reciprocal(denom, approx=True)

        head = jnp.einsum('bqk,bkd->bqd', attn.astype(cdt), v_h,
                          preferred_element_type=jnp.float32)
        head2 = head.reshape(rows, d).astype(cdt)

        # This head's contribution to the output projection.
        acc = acc + jnp.dot(head2, wo[sl, :],
                            preferred_element_type=jnp.float32)

    out_ref[...] = acc.astype(out_ref.dtype)


def mha_self_kernel(x_ref, wqkv_ref, wo_ref, out_ref, *,
                    num_heads, bb, seq, inv_scale):
    """Self-attention step: one activation tile, fused (N, 3N) QKV weights."""
    hidden = wo_ref.shape[0]
    # Single fused QKV projection on the MXU, f32 accumulation.
    qkv = jnp.dot(x_ref[...], wqkv_ref[...],
                  preferred_element_type=jnp.float32)      # (rows, 3N)
    q = qkv[:, :hidden]
    k = qkv[:, hidden:2 * hidden]
    v = qkv[:, 2 * hidden:]
    _attention_core(q, k, v, wo_ref, out_ref, num_heads=num_heads,
                    bb=bb, seq=seq, inv_scale=inv_scale)


def mha_cross_kernel(xq_ref, xk_ref, xv_ref, wq_ref, wk_ref, wv_ref, wo_ref,
                     out_ref, *, num_heads, bb, seq, inv_scale):
    """General step: distinct q/k/v activations, separate projections."""
    q = jnp.dot(xq_ref[...], wq_ref[...], preferred_element_type=jnp.float32)
    k = jnp.dot(xk_ref[...], wk_ref[...], preferred_element_type=jnp.float32)
    v = jnp.dot(xv_ref[...], wv_ref[...], preferred_element_type=jnp.float32)
    _attention_core(q, k, v, wo_ref, out_ref, num_heads=num_heads,
                    bb=bb, seq=seq, inv_scale=inv_scale)


# ----------------------------------------------------------------------------
# Wrapper
# ----------------------------------------------------------------------------
def _pick_block_batch(B, S, target_rows=512, min_grid=2):
    """Largest divisor Bb of B with Bb*S <= max(target_rows, S); prefer
    choices that keep >= min_grid grid steps (v7x has 2 TensorCores)."""
    cands = [c for c in range(1, B + 1)
             if B % c == 0 and c * S <= max(target_rows, S)]
    multi = [c for c in cands if B // c >= min_grid]
    return max(multi) if multi else max(cands)


def _vmem_limit_bytes(rows, N, n_act, compute_dtype, out_dtype):
    """Rough per-step VMEM footprint; raise the scoped limit only if the
    default would not fit. Returns None (use default) for small problems."""
    cd = jnp.dtype(compute_dtype).itemsize
    od = jnp.dtype(out_dtype).itemsize
    acts = n_act * 2 * rows * N * cd       # double-buffered activation tiles
    wts = 2 * 4 * N * N * cd               # QKV (3N^2) + O (N^2) weights, x2
    outs = 2 * rows * N * od               # double-buffered output tile
    live = 6 * rows * N * 4                # f32 q/k/v + accumulator + slack
    est = acts + wts + outs + live
    if est <= 24 * 1024 * 1024:
        return None
    # TODO(synk): on v7x (64 MiB physical VMEM) shrink block_batch instead of
    #             only raising the limit.
    return min(int(est * 1.25), 100 * 1024 * 1024)


def multi_head_attention(xq, xk, xv, wq, wk, wv, wo, *, num_heads,
                         compute_dtype=jnp.bfloat16, block_batch=None,
                         target_rows=512, vmem_limit_bytes=None):
    """Pallas-backed MultiHeadAttention.forward (valid_lens=None).

    xq, xk, xv: (B, S, N) activations. If xk/xv are the same array object as
                xq (self-attention, the common call), only one activation is
                DMAed per grid step and the QKV projection is fused.
    wq, wk, wv, wo: (N, N) weights in PyTorch (out, in) layout.
    compute_dtype: matmul-operand dtype. bf16 by default (all TPU MXUs are
                   bf16-in/f32-acc native); accumulation and softmax are f32.
    """
    B, S, N = xq.shape
    assert N % num_heads == 0
    # TODO(synk): cross-attention with a different key/value sequence length
    #             than the query sequence is not supported by this tiling.
    assert xk.shape == (B, S, N) and xv.shape == (B, S, N)

    key_size = N / num_heads            # matches PyTorch (float division)
    inv_scale = 1.0 / math.sqrt(key_size)

    if block_batch is None:
        block_batch = _pick_block_batch(B, S, target_rows=target_rows)
    assert B % block_batch == 0
    grid_b = B // block_batch
    rows_blk = block_batch * S
    out_dtype = xq.dtype

    self_attn = (xk is xq) and (xv is xq)
    n_act = 1 if self_attn else 3

    if vmem_limit_bytes is None:
        vmem_limit_bytes = _vmem_limit_bytes(rows_blk, N, n_act,
                                             compute_dtype, out_dtype)

    # Pre-transpose weights once on the host side: (out, in) -> (in, out),
    # so the kernel never materializes a weight transpose.
    wq_t = jnp.asarray(wq.T, dtype=compute_dtype)
    wk_t = jnp.asarray(wk.T, dtype=compute_dtype)
    wv_t = jnp.asarray(wv.T, dtype=compute_dtype)
    wo_t = jnp.asarray(wo.T, dtype=compute_dtype)

    # 2-D, lane-dense activation / output tiles (no in-kernel reshape of the
    # input blocks).
    act_spec = pl.BlockSpec((rows_blk, N), lambda b: (b, 0))
    out_spec = pl.BlockSpec((rows_blk, N), lambda b: (b, 0))

    common = dict(num_heads=num_heads, bb=block_batch, seq=S,
                  inv_scale=inv_scale)

    if self_attn:
        x2 = xq.reshape(B * S, N).astype(compute_dtype)
        wqkv = jnp.concatenate([wq_t, wk_t, wv_t], axis=1)   # (N, 3N)
        kernel = functools.partial(mha_self_kernel, **common)
        # Grid-invariant weights: same block index for every grid step.
        in_specs = [act_spec,
                    pl.BlockSpec((N, 3 * N), lambda b: (0, 0)),
                    pl.BlockSpec((N, N), lambda b: (0, 0))]
        args = (x2, wqkv, wo_t)
    else:
        xq2 = xq.reshape(B * S, N).astype(compute_dtype)
        xk2 = xk.reshape(B * S, N).astype(compute_dtype)
        xv2 = xv.reshape(B * S, N).astype(compute_dtype)
        kernel = functools.partial(mha_cross_kernel, **common)
        w_spec = pl.BlockSpec((N, N), lambda b: (0, 0))
        in_specs = [act_spec, act_spec, act_spec,
                    w_spec, w_spec, w_spec, w_spec]
        args = (xq2, xk2, xv2, wq_t, wk_t, wv_t, wo_t)

    out_flat = pl.pallas_call(
        kernel,
        out_shape=jax.ShapeDtypeStruct((B * S, N), out_dtype),
        grid_spec=pltpu.PrefetchScalarGridSpec(
            num_scalar_prefetch=0,
            grid=(grid_b,),
            in_specs=in_specs,
            out_specs=out_spec,
        ),
        compiler_params=pltpu.CompilerParams(
            dimension_semantics=("parallel",),
            vmem_limit_bytes=vmem_limit_bytes),
    )(*args)
    return out_flat.reshape(B, S, N)


# ----------------------------------------------------------------------------
# Pure-JAX reference mirroring the PyTorch forward (valid_lens=None)
# ----------------------------------------------------------------------------
def multi_head_attention_ref(xq, xk, xv, wq, wk, wv, wo, *, num_heads):
    B, S, N = xq.shape
    d = N // num_heads
    key_size = N / num_heads

    def proj(x, w):
        return jnp.einsum('bsn,mn->bsm', x, w)

    q, k, v = proj(xq, wq), proj(xk, wk), proj(xv, wv)

    def split_heads(x):  # transpose_qkv
        x = x.reshape(B, S, num_heads, d).transpose(0, 2, 1, 3)
        return x.reshape(B * num_heads, S, d)

    q, k, v = split_heads(q), split_heads(k), split_heads(v)
    scores = jnp.einsum('bqd,bkd->bqk', q, k) / math.sqrt(key_size)
    attn = jax.nn.softmax(scores, axis=-1)
    out = jnp.einsum('bqk,bkd->bqd', attn, v)
    # transpose_output
    out = out.reshape(B, num_heads, S, d).transpose(0, 2, 1, 3).reshape(B, S, N)
    return jnp.einsum('bsn,mn->bsm', out, wo)


if __name__ == "__main__":
    B, S, N, H = 2, 8, 32, 4   # batch, seq, num_hiddens, num_heads

    key = jax.random.PRNGKey(0)
    k_xq, k_xk, k_xv, k_wq, k_wk, k_wv, k_wo = jax.random.split(key, 7)

    xq = jax.random.normal(k_xq, (B, S, N), dtype=jnp.float32)
    xk = jax.random.normal(k_xk, (B, S, N), dtype=jnp.float32)
    xv = jax.random.normal(k_xv, (B, S, N), dtype=jnp.float32)

    # nn.Linear-style init scale: U(-1/sqrt(N), 1/sqrt(N))
    bound = 1.0 / math.sqrt(N)
    wq = jax.random.uniform(k_wq, (N, N), jnp.float32, -bound, bound)
    wk = jax.random.uniform(k_wk, (N, N), jnp.float32, -bound, bound)
    wv = jax.random.uniform(k_wv, (N, N), jnp.float32, -bound, bound)
    wo = jax.random.uniform(k_wo, (N, N), jnp.float32, -bound, bound)

    # 1) Self-attention (common call): deduped activation + fused QKV, bf16
    #    matmul operands (default path).
    ref_self = multi_head_attention_ref(xq, xq, xq, wq, wk, wv, wo, num_heads=H)
    out_self = multi_head_attention(xq, xq, xq, wq, wk, wv, wo, num_heads=H)
    out_self = jax.block_until_ready(out_self)
    assert out_self.shape == (B, S, N)
    assert jnp.allclose(out_self, ref_self, atol=5e-2, rtol=5e-2), \
        "self-attention bf16 mismatch vs ref"

    # 2) Self-attention, f32 matmul operands (tight check).
    out_self_f32 = multi_head_attention(xq, xq, xq, wq, wk, wv, wo, num_heads=H,
                                        compute_dtype=jnp.float32)
    out_self_f32 = jax.block_until_ready(out_self_f32)
    assert jnp.allclose(out_self_f32, ref_self, atol=2e-3, rtol=2e-3), \
        "self-attention f32 mismatch vs ref"

    # 3) Cross-attention (distinct q/k/v inputs), f32 operands.
    ref_cross = multi_head_attention_ref(xq, xk, xv, wq, wk, wv, wo, num_heads=H)
    out_cross = multi_head_attention(xq, xk, xv, wq, wk, wv, wo, num_heads=H,
                                     compute_dtype=jnp.float32)
    out_cross = jax.block_until_ready(out_cross)
    assert out_cross.shape == (B, S, N)
    assert jnp.allclose(out_cross, ref_cross, atol=2e-3, rtol=2e-3), \
        "cross-attention f32 mismatch vs ref"

    # 4) Cross-attention, bf16 operands (default dtype).
    out_cross_bf16 = multi_head_attention(xq, xk, xv, wq, wk, wv, wo,
                                          num_heads=H)
    out_cross_bf16 = jax.block_until_ready(out_cross_bf16)
    assert jnp.allclose(out_cross_bf16, ref_cross, atol=5e-2, rtol=5e-2), \
        "cross-attention bf16 mismatch vs ref"

    print("KERNEL_OK")
</pallas_src>

<mosaic_0001>
module attributes {stable_mosaic.version = 11 : i64} {
  func.func @mha_self_kernel(%arg0: i32, %arg1: memref<8x32xbf16, #tpu.memory_space<vmem>>, %arg2: memref<32x96xbf16, #tpu.memory_space<vmem>>, %arg3: memref<32x32xbf16, #tpu.memory_space<vmem>>, %arg4: memref<8x32xf32, #tpu.memory_space<vmem>>) attributes {dimension_semantics = [#tpu.dimension_semantics<parallel>], iteration_bounds = array<i64: 2>, scalar_prefetch = 0 : i64, scratch_operands = 0 : i64, tpu.core_type = #tpu.core_type<tc>, window_params = [{transform_indices = @transform_0, window_bounds = array<i64: 8, 32>}, {pipeline_mode = #tpu.pipeline_mode<synchronous>, transform_indices = @transform_1, window_bounds = array<i64: 32, 96>}, {pipeline_mode = #tpu.pipeline_mode<synchronous>, transform_indices = @transform_2, window_bounds = array<i64: 32, 32>}, {transform_indices = @transform_3, window_bounds = array<i64: 8, 32>}]} {
    %c0 = arith.constant 0 : index
    %c0_0 = arith.constant 0 : index
    %0 = vector.load %arg1[%c0, %c0_0] : memref<8x32xbf16, #tpu.memory_space<vmem>>, vector<8x32xbf16>
    %c0_1 = arith.constant 0 : index
    %c0_2 = arith.constant 0 : index
    %1 = vector.load %arg2[%c0_1, %c0_2] : memref<32x96xbf16, #tpu.memory_space<vmem>>, vector<32x96xbf16>
    %cst = arith.constant dense<0.000000e+00> : vector<8x96xf32>
    %2 = tpu.matmul %0, %1, %cst {dimension_numbers = #tpu.dot_dimension_numbers<[1], [0], [0], [1], [0, 0, 1, 1], [], []>} : vector<8x32xbf16>, vector<32x96xbf16>, vector<8x96xf32> -> vector<8x96xf32>
    %3 = vector.extract_strided_slice %2 {offsets = [0, 0], sizes = [8, 32], strides = [1, 1]} : vector<8x96xf32> to vector<8x32xf32>
    %4 = vector.extract_strided_slice %2 {offsets = [0, 32], sizes = [8, 32], strides = [1, 1]} : vector<8x96xf32> to vector<8x32xf32>
    %5 = vector.extract_strided_slice %2 {offsets = [0, 64], sizes = [8, 32], strides = [1, 1]} : vector<8x96xf32> to vector<8x32xf32>
    %cst_3 = arith.constant 0.353553385 : f32
    %6 = vector.broadcast %cst_3 : f32 to vector<8x32xf32>
    %7 = arith.mulf %3, %6 : vector<8x32xf32>
    %8 = arith.truncf %7 : vector<8x32xf32> to vector<8x32xbf16>
    %9 = arith.truncf %4 : vector<8x32xf32> to vector<8x32xbf16>
    %10 = arith.truncf %5 : vector<8x32xf32> to vector<8x32xbf16>
    %c0_4 = arith.constant 0 : index
    %c0_5 = arith.constant 0 : index
    %11 = vector.load %arg3[%c0_4, %c0_5] : memref<32x32xbf16, #tpu.memory_space<vmem>>, vector<32x32xbf16>
    %cst_6 = arith.constant 0.000000e+00 : f32
    %12 = vector.broadcast %cst_6 : f32 to vector<8x32xf32>
    %13 = vector.extract_strided_slice %8 {offsets = [0, 0], sizes = [8, 8], strides = [1, 1]} : vector<8x32xbf16> to vector<8x8xbf16>
    %14 = vector.shape_cast %13 : vector<8x8xbf16> to vector<1x8x8xbf16>
    %15 = vector.extract_strided_slice %9 {offsets = [0, 0], sizes = [8, 8], strides = [1, 1]} : vector<8x32xbf16> to vector<8x8xbf16>
    %16 = vector.shape_cast %15 : vector<8x8xbf16> to vector<1x8x8xbf16>
    %17 = vector.extract_strided_slice %10 {offsets = [0, 0], sizes = [8, 8], strides = [1, 1]} : vector<8x32xbf16> to vector<8x8xbf16>
    %18 = vector.shape_cast %17 : vector<8x8xbf16> to vector<1x8x8xbf16>
    "tpu.trace_start"() <{level = 10 : i32, message = "bqd,bkd->bqk"}> : () -> ()
    %cst_7 = arith.constant dense<0.000000e+00> : vector<1x8x8xf32>
    %19 = tpu.matmul %14, %16, %cst_7 {dimension_numbers = #tpu.dot_dimension_numbers<[2], [2], [1], [1], [0, 0, 0, 1, 1, 1], [0], [0]>} : vector<1x8x8xbf16>, vector<1x8x8xbf16>, vector<1x8x8xf32> -> vector<1x8x8xf32>
    "tpu.trace_stop"() : () -> ()
    %cst_8 = arith.constant dense<0xFF800000> : vector<1x8xf32>
    %20 = vector.multi_reduction <maximumf>, %19, %cst_8 [2] : vector<1x8x8xf32> to vector<1x8xf32>
    %21 = vector.shape_cast %20 : vector<1x8xf32> to vector<1x8x1xf32>
    %22 = vector.broadcast %21 : vector<1x8x1xf32> to vector<1x8x8xf32>
    %23 = arith.subf %19, %22 : vector<1x8x8xf32>
    %24 = math.exp %23 : vector<1x8x8xf32>
    %cst_9 = arith.constant dense<0.000000e+00> : vector<1x8xf32>
    %25 = vector.multi_reduction <add>, %24, %cst_9 [2] : vector<1x8x8xf32> to vector<1x8xf32>
    %26 = vector.shape_cast %25 : vector<1x8xf32> to vector<1x8x1xf32>
    %27 = tpu.reciprocal %26 {approx = true} : vector<1x8x1xf32> -> vector<1x8x1xf32>
    %28 = vector.broadcast %27 : vector<1x8x1xf32> to vector<1x8x8xf32>
    %29 = arith.mulf %24, %28 : vector<1x8x8xf32>
    %30 = arith.truncf %29 : vector<1x8x8xf32> to vector<1x8x8xbf16>
    "tpu.trace_start"() <{level = 10 : i32, message = "bqk,bkd->bqd"}> : () -> ()
    %cst_10 = arith.constant dense<0.000000e+00> : vector<1x8x8xf32>
    %31 = tpu.matmul %30, %18, %cst_10 {dimension_numbers = #tpu.dot_dimension_numbers<[2], [1], [1], [2], [0, 0, 0, 1, 1, 2], [0], [0]>} : vector<1x8x8xbf16>, vector<1x8x8xbf16>, vector<1x8x8xf32> -> vector<1x8x8xf32>
    "tpu.trace_stop"() : () -> ()
    %32 = vector.shape_cast %31 : vector<1x8x8xf32> to vector<8x8xf32>
    %33 = arith.truncf %32 : vector<8x8xf32> to vector<8x8xbf16>
    %34 = vector.extract_strided_slice %11 {offsets = [0, 0], sizes = [8, 32], strides = [1, 1]} : vector<32x32xbf16> to vector<8x32xbf16>
    %cst_11 = arith.constant dense<0.000000e+00> : vector<8x32xf32>
    %35 = tpu.matmul %33, %34, %cst_11 {dimension_numbers = #tpu.dot_dimension_numbers<[1], [0], [0], [1], [0, 0, 1, 1], [], []>} : vector<8x8xbf16>, vector<8x32xbf16>, vector<8x32xf32> -> vector<8x32xf32>
    %36 = arith.addf %12, %35 : vector<8x32xf32>
    %37 = vector.extract_strided_slice %8 {offsets = [0, 8], sizes = [8, 8], strides = [1, 1]} : vector<8x32xbf16> to vector<8x8xbf16>
    %38 = vector.shape_cast %37 : vector<8x8xbf16> to vector<1x8x8xbf16>
    %39 = vector.extract_strided_slice %9 {offsets = [0, 8], sizes = [8, 8], strides = [1, 1]} : vector<8x32xbf16> to vector<8x8xbf16>
    %40 = vector.shape_cast %39 : vector<8x8xbf16> to vector<1x8x8xbf16>
    %41 = vector.extract_strided_slice %10 {offsets = [0, 8], sizes = [8, 8], strides = [1, 1]} : vector<8x32xbf16> to vector<8x8xbf16>
    %42 = vector.shape_cast %41 : vector<8x8xbf16> to vector<1x8x8xbf16>
    "tpu.trace_start"() <{level = 10 : i32, message = "bqd,bkd->bqk"}> : () -> ()
    %cst_12 = arith.constant dense<0.000000e+00> : vector<1x8x8xf32>
    %43 = tpu.matmul %38, %40, %cst_12 {dimension_numbers = #tpu.dot_dimension_numbers<[2], [2], [1], [1], [0, 0, 0, 1, 1, 1], [0], [0]>} : vector<1x8x8xbf16>, vector<1x8x8xbf16>, vector<1x8x8xf32> -> vector<1x8x8xf32>
    "tpu.trace_stop"() : () -> ()
    %cst_13 = arith.constant dense<0xFF800000> : vector<1x8xf32>
    %44 = vector.multi_reduction <maximumf>, %43, %cst_13 [2] : vector<1x8x8xf32> to vector<1x8xf32>
    %45 = vector.shape_cast %44 : vector<1x8xf32> to vector<1x8x1xf32>
    %46 = vector.broadcast %45 : vector<1x8x1xf32> to vector<1x8x8xf32>
    %47 = arith.subf %43, %46 : vector<1x8x8xf32>
    %48 = math.exp %47 : vector<1x8x8xf32>
    %cst_14 = arith.constant dense<0.000000e+00> : vector<1x8xf32>
    %49 = vector.multi_reduction <add>, %48, %cst_14 [2] : vector<1x8x8xf32> to vector<1x8xf32>
    %50 = vector.shape_cast %49 : vector<1x8xf32> to vector<1x8x1xf32>
    %51 = tpu.reciprocal %50 {approx = true} : vector<1x8x1xf32> -> vector<1x8x1xf32>
    %52 = vector.broadcast %51 : vector<1x8x1xf32> to vector<1x8x8xf32>
    %53 = arith.mulf %48, %52 : vector<1x8x8xf32>
    %54 = arith.truncf %53 : vector<1x8x8xf32> to vector<1x8x8xbf16>
    "tpu.trace_start"() <{level = 10 : i32, message = "bqk,bkd->bqd"}> : () -> ()
    %cst_15 = arith.constant dense<0.000000e+00> : vector<1x8x8xf32>
    %55 = tpu.matmul %54, %42, %cst_15 {dimension_numbers = #tpu.dot_dimension_numbers<[2], [1], [1], [2], [0, 0, 0, 1, 1, 2], [0], [0]>} : vector<1x8x8xbf16>, vector<1x8x8xbf16>, vector<1x8x8xf32> -> vector<1x8x8xf32>
    "tpu.trace_stop"() : () -> ()
    %56 = vector.shape_cast %55 : vector<1x8x8xf32> to vector<8x8xf32>
    %57 = arith.truncf %56 : vector<8x8xf32> to vector<8x8xbf16>
    %58 = vector.extract_strided_slice %11 {offsets = [8, 0], sizes = [8, 32], strides = [1, 1]} : vector<32x32xbf16> to vector<8x32xbf16>
    %cst_16 = arith.constant dense<0.000000e+00> : vector<8x32xf32>
    %59 = tpu.matmul %57, %58, %cst_16 {dimension_numbers = #tpu.dot_dimension_numbers<[1], [0], [0], [1], [0, 0, 1, 1], [], []>} : vector<8x8xbf16>, vector<8x32xbf16>, vector<8x32xf32> -> vector<8x32xf32>
    %60 = arith.addf %36, %59 : vector<8x32xf32>
    %61 = vector.extract_strided_slice %8 {offsets = [0, 16], sizes = [8, 8], strides = [1, 1]} : vector<8x32xbf16> to vector<8x8xbf16>
    %62 = vector.shape_cast %61 : vector<8x8xbf16> to vector<1x8x8xbf16>
    %63 = vector.extract_strided_slice %9 {offsets = [0, 16], sizes = [8, 8], strides = [1, 1]} : vector<8x32xbf16> to vector<8x8xbf16>
    %64 = vector.shape_cast %63 : vector<8x8xbf16> to vector<1x8x8xbf16>
    %65 = vector.extract_strided_slice %10 {offsets = [0, 16], sizes = [8, 8], strides = [1, 1]} : vector<8x32xbf16> to vector<8x8xbf16>
    %66 = vector.shape_cast %65 : vector<8x8xbf16> to vector<1x8x8xbf16>
    "tpu.trace_start"() <{level = 10 : i32, message = "bqd,bkd->bqk"}> : () -> ()
    %cst_17 = arith.constant dense<0.000000e+00> : vector<1x8x8xf32>
    %67 = tpu.matmul %62, %64, %cst_17 {dimension_numbers = #tpu.dot_dimension_numbers<[2], [2], [1], [1], [0, 0, 0, 1, 1, 1], [0], [0]>} : vector<1x8x8xbf16>, vector<1x8x8xbf16>, vector<1x8x8xf32> -> vector<1x8x8xf32>
    "tpu.trace_stop"() : () -> ()
    %cst_18 = arith.constant dense<0xFF800000> : vector<1x8xf32>
    %68 = vector.multi_reduction <maximumf>, %67, %cst_18 [2] : vector<1x8x8xf32> to vector<1x8xf32>
    %69 = vector.shape_cast %68 : vector<1x8xf32> to vector<1x8x1xf32>
    %70 = vector.broadcast %69 : vector<1x8x1xf32> to vector<1x8x8xf32>
    %71 = arith.subf %67, %70 : vector<1x8x8xf32>
    %72 = math.exp %71 : vector<1x8x8xf32>
    %cst_19 = arith.constant dense<0.000000e+00> : vector<1x8xf32>
    %73 = vector.multi_reduction <add>, %72, %cst_19 [2] : vector<1x8x8xf32> to vector<1x8xf32>
    %74 = vector.shape_cast %73 : vector<1x8xf32> to vector<1x8x1xf32>
    %75 = tpu.reciprocal %74 {approx = true} : vector<1x8x1xf32> -> vector<1x8x1xf32>
    %76 = vector.broadcast %75 : vector<1x8x1xf32> to vector<1x8x8xf32>
    %77 = arith.mulf %72, %76 : vector<1x8x8xf32>
    %78 = arith.truncf %77 : vector<1x8x8xf32> to vector<1x8x8xbf16>
    "tpu.trace_start"() <{level = 10 : i32, message = "bqk,bkd->bqd"}> : () -> ()
    %cst_20 = arith.constant dense<0.000000e+00> : vector<1x8x8xf32>
    %79 = tpu.matmul %78, %66, %cst_20 {dimension_numbers = #tpu.dot_dimension_numbers<[2], [1], [1], [2], [0, 0, 0, 1, 1, 2], [0], [0]>} : vector<1x8x8xbf16>, vector<1x8x8xbf16>, vector<1x8x8xf32> -> vector<1x8x8xf32>
    "tpu.trace_stop"() : () -> ()
    %80 = vector.shape_cast %79 : vector<1x8x8xf32> to vector<8x8xf32>
    %81 = arith.truncf %80 : vector<8x8xf32> to vector<8x8xbf16>
    %82 = vector.extract_strided_slice %11 {offsets = [16, 0], sizes = [8, 32], strides = [1, 1]} : vector<32x32xbf16> to vector<8x32xbf16>
    %cst_21 = arith.constant dense<0.000000e+00> : vector<8x32xf32>
    %83 = tpu.matmul %81, %82, %cst_21 {dimension_numbers = #tpu.dot_dimension_numbers<[1], [0], [0], [1], [0, 0, 1, 1], [], []>} : vector<8x8xbf16>, vector<8x32xbf16>, vector<8x32xf32> -> vector<8x32xf32>
    %84 = arith.addf %60, %83 : vector<8x32xf32>
    %85 = vector.extract_strided_slice %8 {offsets = [0, 24], sizes = [8, 8], strides = [1, 1]} : vector<8x32xbf16> to vector<8x8xbf16>
    %86 = vector.shape_cast %85 : vector<8x8xbf16> to vector<1x8x8xbf16>
    %87 = vector.extract_strided_slice %9 {offsets = [0, 24], sizes = [8, 8], strides = [1, 1]} : vector<8x32xbf16> to vector<8x8xbf16>
    %88 = vector.shape_cast %87 : vector<8x8xbf16> to vector<1x8x8xbf16>
    %89 = vector.extract_strided_slice %10 {offsets = [0, 24], sizes = [8, 8], strides = [1, 1]} : vector<8x32xbf16> to vector<8x8xbf16>
    %90 = vector.shape_cast %89 : vector<8x8xbf16> to vector<1x8x8xbf16>
    "tpu.trace_start"() <{level = 10 : i32, message = "bqd,bkd->bqk"}> : () -> ()
    %cst_22 = arith.constant dense<0.000000e+00> : vector<1x8x8xf32>
    %91 = tpu.matmul %86, %88, %cst_22 {dimension_numbers = #tpu.dot_dimension_numbers<[2], [2], [1], [1], [0, 0, 0, 1, 1, 1], [0], [0]>} : vector<1x8x8xbf16>, vector<1x8x8xbf16>, vector<1x8x8xf32> -> vector<1x8x8xf32>
    "tpu.trace_stop"() : () -> ()
    %cst_23 = arith.constant dense<0xFF800000> : vector<1x8xf32>
    %92 = vector.multi_reduction <maximumf>, %91, %cst_23 [2] : vector<1x8x8xf32> to vector<1x8xf32>
    %93 = vector.shape_cast %92 : vector<1x8xf32> to vector<1x8x1xf32>
    %94 = vector.broadcast %93 : vector<1x8x1xf32> to vector<1x8x8xf32>
    %95 = arith.subf %91, %94 : vector<1x8x8xf32>
    %96 = math.exp %95 : vector<1x8x8xf32>
    %cst_24 = arith.constant dense<0.000000e+00> : vector<1x8xf32>
    %97 = vector.multi_reduction <add>, %96, %cst_24 [2] : vector<1x8x8xf32> to vector<1x8xf32>
    %98 = vector.shape_cast %97 : vector<1x8xf32> to vector<1x8x1xf32>
    %99 = tpu.reciprocal %98 {approx = true} : vector<1x8x1xf32> -> vector<1x8x1xf32>
    %100 = vector.broadcast %99 : vector<1x8x1xf32> to vector<1x8x8xf32>
    %101 = arith.mulf %96, %100 : vector<1x8x8xf32>
    %102 = arith.truncf %101 : vector<1x8x8xf32> to vector<1x8x8xbf16>
    "tpu.trace_start"() <{level = 10 : i32, message = "bqk,bkd->bqd"}> : () -> ()
    %cst_25 = arith.constant dense<0.000000e+00> : vector<1x8x8xf32>
    %103 = tpu.matmul %102, %90, %cst_25 {dimension_numbers = #tpu.dot_dimension_numbers<[2], [1], [1], [2], [0, 0, 0, 1, 1, 2], [0], [0]>} : vector<1x8x8xbf16>, vector<1x8x8xbf16>, vector<1x8x8xf32> -> vector<1x8x8xf32>
    "tpu.trace_stop"() : () -> ()
    %104 = vector.shape_cast %103 : vector<1x8x8xf32> to vector<8x8xf32>
    %105 = arith.truncf %104 : vector<8x8xf32> to vector<8x8xbf16>
    %106 = vector.extract_strided_slice %11 {offsets = [24, 0], sizes = [8, 32], strides = [1, 1]} : vector<32x32xbf16> to vector<8x32xbf16>
    %cst_26 = arith.constant dense<0.000000e+00> : vector<8x32xf32>
    %107 = tpu.matmul %105, %106, %cst_26 {dimension_numbers = #tpu.dot_dimension_numbers<[1], [0], [0], [1], [0, 0, 1, 1], [], []>} : vector<8x8xbf16>, vector<8x32xbf16>, vector<8x32xf32> -> vector<8x32xf32>
    %108 = arith.addf %84, %107 : vector<8x32xf32>
    %c0_27 = arith.constant 0 : index
    %c0_28 = arith.constant 0 : index
    %109 = vector.load %arg4[%c0_27, %c0_28] : memref<8x32xf32, #tpu.memory_space<vmem>>, vector<8x32xf32>
    tpu.vector_store %arg4[%c0_27, %c0_28], %108 {strides = array<i32>} : memref<8x32xf32, #tpu.memory_space<vmem>>, vector<8x32xf32>,
    return
  }
  func.func @transform_0(%arg0: i32) -> (i32, i32) {
    %c0_i32 = arith.constant 0 : i32
    %c0_i32_0 = arith.constant 0 : i32
    return %arg0, %c0_i32 : i32, i32
  }
  func.func @transform_1(%arg0: i32) -> (i32, i32) {
    %c0_i32 = arith.constant 0 : i32
    %c0_i32_0 = arith.constant 0 : i32
    %c0_i32_1 = arith.constant 0 : i32
    return %c0_i32, %c0_i32_0 : i32, i32
  }
  func.func @transform_2(%arg0: i32) -> (i32, i32) {
    %c0_i32 = arith.constant 0 : i32
    %c0_i32_0 = arith.constant 0 : i32
    %c0_i32_1 = arith.constant 0 : i32
    return %c0_i32, %c0_i32_0 : i32, i32
  }
  func.func @transform_3(%arg0: i32) -> (i32, i32) {
    %c0_i32 = arith.constant 0 : i32
    %c0_i32_0 = arith.constant 0 : i32
    return %arg0, %c0_i32 : i32, i32
  }
}

</mosaic_0001>

<llo_original>
// kernel: tpu_custom_call.1
$region0: #{tpu_custom_call.1}
  #allocation0 [shape = 'u32[]', space=smem, size = 0x4, offset = 0x4, fixed_abs, tag = 'smem constant byte address 0x4 - core index']
  #allocation1 [shape = 'u32[144,128]{1,0:T(1,128)}', space=vmem, size = 0x12000, scoped, tag = 'internal scratch']
  %s0 = inlined_call_operand.hbm [shape: bf16[16,32], index: 0, kind: input, shape index: {}]
  %s1 = inlined_call_operand.hbm [shape: bf16[32,96], index: 1, kind: input, shape index: {}]
  %s2 = inlined_call_operand.hbm [shape: bf16[32,32], index: 2, kind: input, shape index: {}]
  %s3 = inlined_call_operand.hbm [shape: f32[16,32], index: 3, kind: output, shape index: {}]
  %s4 = sld [smem:[#allocation0]]
  $region57: #{tpu_custom_call.1} parent=0
    _
  %s6 = ssub.s32 1, %s4
  %s7 = scalar_select 0, %s6, %s4
  $region1: #{tpu_custom_call.1} parent=0
    #allocation2 [shape = 'u8[4096]{0}', space=vmem, size = 0x1000, scoped, tag = 'input window, operand 0']
    #allocation3 [shape = 's32[2]{0}', space=sflag, size = 0x8, scoped, tag = 'scoped memory for tpu_custom_call.1']
    #allocation4 [shape = 's32[2]{0}', space=sflag, size = 0x8, scoped, tag = 'scoped memory for tpu_custom_call.1']
    #allocation5 [shape = 'u8[8192]{0}', space=vmem, size = 0x2000, scoped, tag = 'input window, operand 1, single buffered']
    #allocation6 [shape = 's32[1]{0}', space=sflag, size = 0x4, scoped, tag = 'scoped memory for tpu_custom_call.1']
    #allocation7 [shape = 'u8[8192]{0}', space=vmem, size = 0x2000, scoped, tag = 'input window, operand 2, single buffered']
    #allocation8 [shape = 'u8[8192]{0}', space=vmem, size = 0x2000, scoped, tag = 'output window, operand 0']
    %8 = vsyncpa [#allocation3], 0
    %s9 = scalar_lea.sflag [#allocation3], 1
    %10 = vsyncpa %s9, 0
    %11 = vsyncpa [#allocation6], 0
    %12 = vsyncpa [#allocation4], 0
    %s13 = scalar_lea.sflag [#allocation4], 1
    %14 = vsyncpa %s13, 0
    loop: start=0, step=1, limit=4
    $region2: #{tpu_custom_call.1} parent=1 // loop_pre_header
      _
    $region3: #{tpu_custom_call.1} parent=1 // loop_header
      %s16 = sphi 0, %s20
      %p17 = scmp.ge.s32.totalorder %s16, 4
      %s26 = sphi 0, %s28
      %s29 = sphi 0, %s26
      %s30 = sphi 0, %s29
      %s46 = sphi 0, %s30
      %s50 = sphi 0, %s50
      %s52 = sphi 0, %s50
      %s53 = sphi 0, %s52
      %s67 = sphi 0, %s53
      %s71 = sphi 0, %s71
      %s73 = sphi 0, %s71
      %s74 = sphi 0, %s73
      %s88 = sphi 0, %s74
      %s94 = sphi 0, %s96
      %s97 = sphi 0, %s94
      %s98 = sphi 0, %s97
      %s114 = sphi 0, %s98
    $region4: #{tpu_custom_call.1} parent=1 // loop_header_branch
      %19 = sbr.rel (%p17) target = $region8
    $region5: #{tpu_custom_call.1} parent=1 // loop_body
      %s21 = ssub.s32 %s16, 1
      %s22 = ssub.s32 %s16, 2
      %s23 = sadd.s32 %s16, 1
      %s24 = ssub.s32 %s16, %s23
      %p25 = scmp.eq.s32.totalorder %s24, 0
      %s27 = sadd.s32 %s26, 1
      %s28 = scalar_select %p25, %s26, %s27
      %p31 = pneg %p25
      %p32 = scmp.eq.s32.totalorder %s16, 1
      %p33 = por %p31, %p32
      %p34 = scmp.ne.s32.totalorder %s26, %s29
      %p35 = scmp.eq.s32.totalorder %s16, 0
      %p36 = por %p34, %p35
      %p37 = scmp.ne.s32.totalorder %s26, %s29
      %p38 = scmp.eq.s32.totalorder %s21, 1
      %p39 = por %p37, %p38
      %p40 = scmp.ne.s32.totalorder %s29, %s30
      %p41 = scmp.eq.s32.totalorder %s21, 0
      %p42 = por %p40, %p41
      %p43 = scmp.ne.s32.totalorder %s29, %s30
      %p44 = scmp.eq.s32.totalorder %s22, 1
      %p45 = por %p43, %p44
      %p47 = scmp.ne.s32.totalorder %s30, %s46
      %p48 = scmp.eq.s32.totalorder %s22, 0
      %p49 = por %p47, %p48
      %s51 = sadd.s32 %s50, 1
      %p54 = scmp.eq.s32.totalorder %s16, 1
      %p55 = scmp.ne.s32.totalorder %s50, %s52
      %p56 = scmp.eq.s32.totalorder %s16, 0
      %p57 = por %p55, %p56
      %p58 = scmp.ne.s32.totalorder %s50, %s52
      %p59 = scmp.eq.s32.totalorder %s21, 1
      %p60 = por %p58, %p59
      %p61 = scmp.ne.s32.totalorder %s52, %s53
      %p62 = scmp.eq.s32.totalorder %s21, 0
      %p63 = por %p61, %p62
      %p64 = scmp.ne.s32.totalorder %s52, %s53
      %p65 = scmp.eq.s32.totalorder %s22, 1
      %p66 = por %p64, %p65
      %p68 = scmp.ne.s32.totalorder %s53, %s67
      %p69 = scmp.eq.s32.totalorder %s22, 0
      %p70 = por %p68, %p69
      %s72 = sadd.s32 %s71, 1
      %p75 = scmp.eq.s32.totalorder %s16, 1
      %p76 = scmp.ne.s32.totalorder %s71, %s73
      %p77 = scmp.eq.s32.totalorder %s16, 0
      %p78 = por %p76, %p77
      %p79 = scmp.ne.s32.totalorder %s71, %s73
      %p80 = scmp.eq.s32.totalorder %s21, 1
      %p81 = por %p79, %p80
      %p82 = scmp.ne.s32.totalorder %s73, %s74
      %p83 = scmp.eq.s32.totalorder %s21, 0
      %p84 = por %p82, %p83
      %p85 = scmp.ne.s32.totalorder %s73, %s74
      %p86 = scmp.eq.s32.totalorder %s22, 1
      %p87 = por %p85, %p86
      %p89 = scmp.ne.s32.totalorder %s74, %s88
      %p90 = scmp.eq.s32.totalorder %s22, 0
      %p91 = por %p89, %p90
      %s92 = ssub.s32 %s16, %s23
      %p93 = scmp.eq.s32.totalorder %s92, 0
      %s95 = sadd.s32 %s94, 1
      %s96 = scalar_select %p93, %s94, %s95
      %p99 = pneg %p93
      %p100 = scmp.eq.s32.totalorder %s16, 1
      %p101 = por %p99, %p100
      %p102 = scmp.ne.s32.totalorder %s94, %s97
      %p103 = scmp.eq.s32.totalorder %s16, 0
      %p104 = por %p102, %p103
      %p105 = scmp.ne.s32.totalorder %s94, %s97
      %p106 = scmp.eq.s32.totalorder %s21, 1
      %p107 = por %p105, %p106
      %p108 = scmp.ne.s32.totalorder %s97, %s98
      %p109 = scmp.eq.s32.totalorder %s21, 0
      %p110 = por %p108, %p109
      %p111 = scmp.ne.s32.totalorder %s97, %s98
      %p112 = scmp.eq.s32.totalorder %s22, 1
      %p113 = por %p111, %p112
      %p115 = scmp.ne.s32.totalorder %s98, %s114
      %p116 = scmp.eq.s32.totalorder %s22, 0
      %p117 = por %p115, %p116
      %p118 = scmp.le.s32.totalorder 1, %s16
      %p119 = scmp.lt.s32.totalorder %s16, 3
      %p120 = pnand %p118, %p119
      %p121 = pneg %p120
      // Predicated region
      $region9: #{tpu_custom_call.1} parent=5 // pred_check
        _
      $region10: #{tpu_custom_call.1} parent=5 // pred_check_branch
        %123 = sbr.rel (%p120) target = $region12
      $region11: #{tpu_custom_call.1} parent=5 // pred_region
        %s124 = ssub.s32 %s16, 1
        // Predicated region
        $region13: #{tpu_custom_call.1} parent=11 // pred_check
          %p125 = pneg %p63
        $region14: #{tpu_custom_call.1} parent=11 // pred_check_branch
          %127 = sbr.rel (%p125) target = $region16
        $region15: #{tpu_custom_call.1} parent=11 // pred_region
          %s129 = ssub.s32 256, 256
          %130 = vsyncadd [#allocation6], %s129
          %s131 = sshll.u32 [#allocation5], 4
          %s132 = int_to_ptr.vmem [resolvable:$true] %s131
          %137 = dma.hbm_to_vmem [thread:$0]  %s1, 256, %s132, [#allocation6], 64, 64, 4
        $region16: #{tpu_custom_call.1} parent=11 // pred_fallthru
          _
        // Predicated region
        $region17: #{tpu_custom_call.1} parent=11 // pred_check
          %p138 = pneg %p84
        $region18: #{tpu_custom_call.1} parent=11 // pred_check_branch
          %140 = sbr.rel (%p138) target = $region20
        $region19: #{tpu_custom_call.1} parent=11 // pred_region
          %s142 = ssub.s32 256, 256
          %143 = vsyncadd [#allocation6], %s142
          %s144 = sshll.u32 [#allocation7], 4
          %s145 = int_to_ptr.vmem [resolvable:$true] %s144
          %150 = dma.hbm_to_vmem [thread:$0]  %s2, 256, %s145, [#allocation6], 64, 64, 4
        $region20: #{tpu_custom_call.1} parent=11 // pred_fallthru
          _
      $region12: #{tpu_custom_call.1} parent=5 // pred_fallthru
        _
      %p151 = scmp.lt.s32.totalorder %s16, 2
      // Predicated region
      $region21: #{tpu_custom_call.1} parent=5 // pred_check
        %p152 = pneg %p151
      $region22: #{tpu_custom_call.1} parent=5 // pred_check_branch
        %154 = sbr.rel (%p152) target = $region24
      $region23: #{tpu_custom_call.1} parent=5 // pred_region
        // Predicated region
        $region25: #{tpu_custom_call.1} parent=23 // pred_check
          %p155 = pneg %p36
        $region26: #{tpu_custom_call.1} parent=23 // pred_check_branch
          %157 = sbr.rel (%p155) target = $region28
        $region27: #{tpu_custom_call.1} parent=23 // pred_region
          %s158 = sand.u32 %s26, 1
          %s159 = scalar_lea.sflag [#allocation3], %s158
          %s160 = sand.u32 %s26, 1
          %s161 = smul.addr %s160, 4
          %s162 = scalar_lea.vmem [#allocation2], %s161
          %s164 = ssub.s32 64, 64
          %165 = vsyncadd %s159, %s164
          %s166 = smul.addr %s16, 64
          %s167 = scalar_lea.hbm %s0, %s166
          %s169 = sshll.u32 %s162, 4
          %s170 = int_to_ptr.vmem [resolvable:$true] %s169
          %172 = dma.hbm_to_vmem [thread:$0]  %s167, 64, %s170, %s159
        $region28: #{tpu_custom_call.1} parent=23 // pred_fallthru
          _
      $region24: #{tpu_custom_call.1} parent=5 // pred_fallthru
        _
      %p173 = scmp.le.s32.totalorder 1, %s16
      %p174 = scmp.lt.s32.totalorder %s16, 3
      %p175 = pnand %p173, %p174
      %p176 = pneg %p175
      // Predicated region
      $region29: #{tpu_custom_call.1} parent=5 // pred_check
        _
      $region30: #{tpu_custom_call.1} parent=5 // pred_check_branch
        %178 = sbr.rel (%p175) target = $region32
      $region31: #{tpu_custom_call.1} parent=5 // pred_region
        %s179 = ssub.s32 %s16, 1
        %s180 = sand.u32 %s29, 1
        %s181 = scalar_lea.sflag [#allocation3], %s180
        %s182 = sand.u32 %s29, 1
        %s183 = smul.addr %s182, 4
        %s184 = scalar_lea.vmem [#allocation2], %s183
        // Predicated region
        $region33: #{tpu_custom_call.1} parent=31 // pred_check
          %p185 = pneg %p42
        $region34: #{tpu_custom_call.1} parent=31 // pred_check_branch
          %187 = sbr.rel (%p185) target = $region36
        $region35: #{tpu_custom_call.1} parent=31 // pred_region
          %188 = dma.done %s181, 64
        $region36: #{tpu_custom_call.1} parent=31 // pred_fallthru
          _
        // Predicated region
        $region37: #{tpu_custom_call.1} parent=31 // pred_check
          %p189 = pneg %p63
        $region38: #{tpu_custom_call.1} parent=31 // pred_check_branch
          %191 = sbr.rel (%p189) target = $region40
        $region39: #{tpu_custom_call.1} parent=31 // pred_region
          %192 = dma.done [#allocation6], 256
        $region40: #{tpu_custom_call.1} parent=31 // pred_fallthru
          _
        // Predicated region
        $region41: #{tpu_custom_call.1} parent=31 // pred_check
          %p193 = pneg %p84
        $region42: #{tpu_custom_call.1} parent=31 // pred_check_branch
          %195 = sbr.rel (%p193) target = $region44
        $region43: #{tpu_custom_call.1} parent=31 // pred_region
          %196 = dma.done [#allocation6], 256
        $region44: #{tpu_custom_call.1} parent=31 // pred_fallthru
          _
        %s197 = sand.u32 %s29, 1
        %s198 = scalar_lea.sflag [#allocation3], %s197
        %s199 = sand.u32 %s29, 1
        %s200 = smul.addr %s199, 4
        %s201 = scalar_lea.vmem [#allocation2], %s200
        %p202 = pneg %p42
        %p203 = pneg %p39
        %p204 = pneg %p63
        %p205 = pneg %p60
        %p206 = pneg %p84
        %p207 = pneg %p81
        %p208 = pneg %p110
        %p209 = pneg %p107
        %s210 = sand.u32 %s97, 1
        %s211 = scalar_lea.sflag [#allocation4], %s210
        %s212 = sand.u32 %s97, 1
        %s213 = smul.addr %s212, 8
        %s214 = scalar_lea.vmem [#allocation8], %s213
        %v216 = vld [vmem:[%s184] sm:$0xf]
        %v217 = vld [vmem:[#allocation5] sm:$0xf]
        %v218 = vld [vmem:[#allocation5 + $0x4] sm:$0xf]
        %v219 = vld [vmem:[#allocation5 + $0x8] sm:$0xf]
        %v220 = vld [vmem:[#allocation5 + $0xc] sm:$0xf]
        %v225 = vunpack.c.l.b16 %v217
        %v226 = vunpack.c.l.b16 %v218
        %v227 = vunpack.c.l.b16 %v219
        %v228 = vunpack.c.l.b16 %v220
        %v229 = vpack.c.b16 %v226, %v225
        %v230 = vpack.c.b16 %v228, %v227
        %vm233 = vcmask 261120
        %v235 = vsel %vm233, %v216, 0
        %237 = vmatprep.subr.bf16.mxu0 0
        %238 = vmatpush1.bf16.msra.mxu0 %v229
        %239 = vmatprep.subr.bf16.mxu0 0
        %240 = vmatpush1.bf16.msra.mxu0 %v230
        %241 = vmatprep.subr.bf16.mxu0 0
        %242 = vmatpush1.bf16.msra.mxu0 0
        %243 = vmatprep.subr.bf16.mxu0 0
        %244 = vmatpush1.bf16.msra.mxu0 0
        %245 = vmatprep.subr.bf16.mxu0 0
        %246 = vmatpush1.bf16.msra.mxu0 0
        %247 = vmatprep.subr.bf16.mxu0 0
        %248 = vmatpush1.bf16.msra.mxu0 0
        %249 = vmatprep.subr.bf16.mxu0 0
        %250 = vmatpush1.bf16.msra.mxu0 0
        %251 = vmatprep.subr.bf16.mxu0 0
        %252 = vmatpush1.bf16.msra.mxu0 0
        %253 = vmatprep.subr.bf16.mxu0 0
        %254 = vmatpush1.bf16.msra.mxu0 0
        %255 = vmatprep.subr.bf16.mxu0 0
        %256 = vmatpush1.bf16.msra.mxu0 0
        %257 = vmatprep.subr.bf16.mxu0 0
        %258 = vmatpush1.bf16.msra.mxu0 0
        %259 = vmatprep.subr.bf16.mxu0 0
        %260 = vmatpush1.bf16.msra.mxu0 0
        %261 = vmatprep.subr.bf16.mxu0 0
        %262 = vmatpush1.bf16.msra.mxu0 0
        %263 = vmatprep.subr.bf16.mxu0 0
        %264 = vmatpush1.bf16.msra.mxu0 0
        %265 = vmatprep.subr.bf16.mxu0 0
        %266 = vmatpush1.bf16.msra.mxu0 0
        %267 = vmatprep.subr.bf16.mxu0 0
        %268 = vmatpush1.bf16.msra.mxu0 0
        %269 = vmatprep.mubr.bf16.mxu0 0
        %270 = vmatmul.mubr.bf16.gmra.mrb[0].mxu0 %v235
        %v271 = vpop.f32.mrb[0].mxu0
        %v272 = vadd.f32 0.0, %v271
        %v273 = vpop.f32.mrb[0].mxu0
        %v274 = vpop.f32.mrb[0].mxu0
        %v275 = vpop.f32.mrb[0].mxu0
        %276 = vdwg.mxu0
        %v277 = vmul.f32 %v272, 0.35355338
        %v278 = vpack.c.bf16 %v277, %v277
        %v279 = vpack.c.bf16 %v272, %v272
        %v280 = vld [vmem:[#allocation7] sm:$0xf]
        %v281 = vld [vmem:[#allocation7 + $0x4] sm:$0xf]
        %v282 = vld [vmem:[#allocation7 + $0x8] sm:$0xf]
        %v283 = vld [vmem:[#allocation7 + $0xc] sm:$0xf]
        %285 = vrot.lane.b32.xlu0 %v279, 96
        %v286 = vpop.permute.xlu0 %285
        %vm287 = vcmask 64512
        %v289 = vsel %vm287, %v278, 0
        %v292 = vsel %vm287, %v286, 0
        %294 = vmatprep.subr.bf16.mxu0 0
        %295 = vmatpush1.bf16.xpose.msra.mxu0 %v292
        %296 = vmatprep.subr.bf16.mxu0 0
        %297 = vmatpush1.bf16.xpose.msra.mxu0 0
        %298 = vmatprep.subr.bf16.mxu0 0
        %299 = vmatpush1.bf16.xpose.msra.mxu0 0
        %300 = vmatprep.subr.bf16.mxu0 0
        %301 = vmatpush1.bf16.xpose.msra.mxu0 0
        %302 = vmatprep.subr.bf16.mxu0 0
        %303 = vmatpush1.bf16.xpose.msra.mxu0 0
        %304 = vmatprep.subr.bf16.mxu0 0
        %305 = vmatpush1.bf16.xpose.msra.mxu0 0
        %306 = vmatprep.subr.bf16.mxu0 0
        %307 = vmatpush1.bf16.xpose.msra.mxu0 0
        %308 = vmatprep.subr.bf16.mxu0 0
        %309 = vmatpush1.bf16.xpose.msra.mxu0 0
        %310 = vmatprep.subr.bf16.mxu0 0
        %311 = vmatpush1.bf16.xpose.msra.mxu0 0
        %312 = vmatprep.subr.bf16.mxu0 0
        %313 = vmatpush1.bf16.xpose.msra.mxu0 0
        %314 = vmatprep.subr.bf16.mxu0 0
        %315 = vmatpush1.bf16.xpose.msra.mxu0 0
        %316 = vmatprep.subr.bf16.mxu0 0
        %317 = vmatpush1.bf16.xpose.msra.mxu0 0
        %318 = vmatprep.subr.bf16.mxu0 0
        %319 = vmatpush1.bf16.xpose.msra.mxu0 0
        %320 = vmatprep.subr.bf16.mxu0 0
        %321 = vmatpush1.bf16.xpose.msra.mxu0 0
        %322 = vmatprep.subr.bf16.mxu0 0
        %323 = vmatpush1.bf16.xpose.msra.mxu0 0
        %324 = vmatprep.subr.bf16.mxu0 0
        %325 = vmatpush1.bf16.xpose.msra.mxu0 0
        %326 = vmatprep.mubr.bf16.mxu0 0
        %327 = vmatmul.mubr.bf16.gmra.mrb[0].mxu0 %v289
        %v328 = vpop.f32.mrb[0].mxu0
        %v329 = vadd.f32 0.0, %v328
        %v330 = vpop.f32.mrb[0].mxu0
        %v331 = vpop.f32.mrb[0].mxu0
        %v332 = vpop.f32.mrb[0].mxu0
        %333 = vdwg.mxu0
        %v334 = vsel %vm287, %v329, -inf
        %335 = vmax.xlane.f32.xlu0 %v334
        %v336 = vpop.xlane.xlu0 %335
        %v337 = vsub.f32 %v329, %v336
        %v338 = vmul.f32 %v337, 1.442695
        %v339 = vpow.pop %v338
        %v340 = vsel %vm287, %v339, 0.0
        %341 = vadd.xlane.f32.xlu0 %v340
        %v342 = vpop.xlane.xlu0 %341
        %v343 = vrcp.pop %v342
        %v344 = vmul.f32 %v339, %v343
        %v345 = vpack.c.bf16 %v344, %v344
        %346 = vrot.lane.b32.xlu0 %v279, 64
        %v347 = vpop.permute.xlu0 %346
        %v349 = vsel %vm287, %v345, 0
        %vm351 = vcmask 1043456
        %v353 = vsel %vm351, %v347, 0
        %355 = vmatprep.subr.bf16.mxu0 0
        %356 = vmatpush1.bf16.msra.mxu0 %v353
        %357 = vmatprep.subr.bf16.mxu0 0
        %358 = vmatpush1.bf16.msra.mxu0 0
        %359 = vmatprep.subr.bf16.mxu0 0
        %360 = vmatpush1.bf16.msra.mxu0 0
        %361 = vmatprep.subr.bf16.mxu0 0
        %362 = vmatpush1.bf16.msra.mxu0 0
        %363 = vmatprep.subr.bf16.mxu0 0
        %364 = vmatpush1.bf16.msra.mxu0 0
        %365 = vmatprep.subr.bf16.mxu0 0
        %366 = vmatpush1.bf16.msra.mxu0 0
        %367 = vmatprep.subr.bf16.mxu0 0
        %368 = vmatpush1.bf16.msra.mxu0 0
        %369 = vmatprep.subr.bf16.mxu0 0
        %370 = vmatpush1.bf16.msra.mxu0 0
        %371 = vmatprep.subr.bf16.mxu0 0
        %372 = vmatpush1.bf16.msra.mxu0 0
        %373 = vmatprep.subr.bf16.mxu0 0
        %374 = vmatpush1.bf16.msra.mxu0 0
        %375 = vmatprep.subr.bf16.mxu0 0
        %376 = vmatpush1.bf16.msra.mxu0 0
        %377 = vmatprep.subr.bf16.mxu0 0
        %378 = vmatpush1.bf16.msra.mxu0 0
        %379 = vmatprep.subr.bf16.mxu0 0
        %380 = vmatpush1.bf16.msra.mxu0 0
        %381 = vmatprep.subr.bf16.mxu0 0
        %382 = vmatpush1.bf16.msra.mxu0 0
        %383 = vmatprep.subr.bf16.mxu0 0
        %384 = vmatpush1.bf16.msra.mxu0 0
        %385 = vmatprep.subr.bf16.mxu0 0
        %386 = vmatpush1.bf16.msra.mxu0 0
        %387 = vmatprep.mubr.bf16.mxu0 0
        %388 = vmatmul.mubr.bf16.gmra.mrb[0].mxu0 %v349
        %v389 = vpop.f32.mrb[0].mxu0
        %v390 = vadd.f32 0.0, %v389
        %v391 = vpop.f32.mrb[0].mxu0
        %v392 = vpop.f32.mrb[0].mxu0
        %v393 = vpop.f32.mrb[0].mxu0
        %394 = vdwg.mxu0
        %v395 = vpack.c.bf16 %v390, %v390
        %397 = vrot.lane.b32.xlu0 %v278, 120
        %v398 = vpop.permute.xlu0 %397
        %399 = vrot.lane.b32.xlu0 %v279, 88
        %v400 = vpop.permute.xlu0 %399
        %v402 = vsel %vm287, %v398, 0
        %v405 = vsel %vm287, %v400, 0
        %407 = vmatprep.subr.bf16.mxu0 0
        %408 = vmatpush1.bf16.xpose.msra.mxu0 %v405
        %409 = vmatprep.subr.bf16.mxu0 0
        %410 = vmatpush1.bf16.xpose.msra.mxu0 0
        %411 = vmatprep.subr.bf16.mxu0 0
        %412 = vmatpush1.bf16.xpose.msra.mxu0 0
        %413 = vmatprep.subr.bf16.mxu0 0
        %414 = vmatpush1.bf16.xpose.msra.mxu0 0
        %415 = vmatprep.subr.bf16.mxu0 0
        %416 = vmatpush1.bf16.xpose.msra.mxu0 0
        %417 = vmatprep.subr.bf16.mxu0 0
        %418 = vmatpush1.bf16.xpose.msra.mxu0 0
        %419 = vmatprep.subr.bf16.mxu0 0
        %420 = vmatpush1.bf16.xpose.msra.mxu0 0
        %421 = vmatprep.subr.bf16.mxu0 0
        %422 = vmatpush1.bf16.xpose.msra.mxu0 0
        %423 = vmatprep.subr.bf16.mxu0 0
        %424 = vmatpush1.bf16.xpose.msra.mxu0 0
        %425 = vmatprep.subr.bf16.mxu0 0
        %426 = vmatpush1.bf16.xpose.msra.mxu0 0
        %427 = vmatprep.subr.bf16.mxu0 0
        %428 = vmatpush1.bf16.xpose.msra.mxu0 0
        %429 = vmatprep.subr.bf16.mxu0 0
        %430 = vmatpush1.bf16.xpose.msra.mxu0 0
        %431 = vmatprep.subr.bf16.mxu0 0
        %432 = vmatpush1.bf16.xpose.msra.mxu0 0
        %433 = vmatprep.subr.bf16.mxu0 0
        %434 = vmatpush1.bf16.xpose.msra.mxu0 0
        %435 = vmatprep.subr.bf16.mxu0 0
        %436 = vmatpush1.bf16.xpose.msra.mxu0 0
        %437 = vmatprep.subr.bf16.mxu0 0
        %438 = vmatpush1.bf16.xpose.msra.mxu0 0
        %439 = vmatprep.mubr.bf16.mxu0 0
        %440 = vmatmul.mubr.bf16.gmra.mrb[0].mxu0 %v402
        %v441 = vpop.f32.mrb[0].mxu0
        %v442 = vadd.f32 0.0, %v441
        %v443 = vpop.f32.mrb[0].mxu0
        %v444 = vpop.f32.mrb[0].mxu0
        %v445 = vpop.f32.mrb[0].mxu0
        %446 = vdwg.mxu0
        %v447 = vsel %vm287, %v442, -inf
        %448 = vmax.xlane.f32.xlu0 %v447
        %v449 = vpop.xlane.xlu0 %448
        %v450 = vsub.f32 %v442, %v449
        %v451 = vmul.f32 %v450, 1.442695
        %v452 = vpow.pop %v451
        %v453 = vsel %vm287, %v452, 0.0
        %454 = vadd.xlane.f32.xlu0 %v453
        %v455 = vpop.xlane.xlu0 %454
        %v456 = vrcp.pop %v455
        %v457 = vmul.f32 %v452, %v456
        %v458 = vpack.c.bf16 %v457, %v457
        %459 = vrot.lane.b32.xlu0 %v279, 56
        %v460 = vpop.permute.xlu0 %459
        %v462 = vsel %vm287, %v458, 0
        %v465 = vsel %vm351, %v460, 0
        %467 = vmatprep.subr.bf16.mxu0 0
        %468 = vmatpush1.bf16.msra.mxu0 %v465
        %469 = vmatprep.subr.bf16.mxu0 0
        %470 = vmatpush1.bf16.msra.mxu0 0
        %471 = vmatprep.subr.bf16.mxu0 0
        %472 = vmatpush1.bf16.msra.mxu0 0
        %473 = vmatprep.subr.bf16.mxu0 0
        %474 = vmatpush1.bf16.msra.mxu0 0
        %475 = vmatprep.subr.bf16.mxu0 0
        %476 = vmatpush1.bf16.msra.mxu0 0
        %477 = vmatprep.subr.bf16.mxu0 0
        %478 = vmatpush1.bf16.msra.mxu0 0
        %479 = vmatprep.subr.bf16.mxu0 0
        %480 = vmatpush1.bf16.msra.mxu0 0
        %481 = vmatprep.subr.bf16.mxu0 0
        %482 = vmatpush1.bf16.msra.mxu0 0
        %483 = vmatprep.subr.bf16.mxu0 0
        %484 = vmatpush1.bf16.msra.mxu0 0
        %485 = vmatprep.subr.bf16.mxu0 0
        %486 = vmatpush1.bf16.msra.mxu0 0
        %487 = vmatprep.subr.bf16.mxu0 0
        %488 = vmatpush1.bf16.msra.mxu0 0
        %489 = vmatprep.subr.bf16.mxu0 0
        %490 = vmatpush1.bf16.msra.mxu0 0
        %491 = vmatprep.subr.bf16.mxu0 0
        %492 = vmatpush1.bf16.msra.mxu0 0
        %493 = vmatprep.subr.bf16.mxu0 0
        %494 = vmatpush1.bf16.msra.mxu0 0
        %495 = vmatprep.subr.bf16.mxu0 0
        %496 = vmatpush1.bf16.msra.mxu0 0
        %497 = vmatprep.subr.bf16.mxu0 0
        %498 = vmatpush1.bf16.msra.mxu0 0
        %499 = vmatprep.mubr.bf16.mxu0 0
        %500 = vmatmul.mubr.bf16.gmra.mrb[0].mxu0 %v462
        %v501 = vpop.f32.mrb[0].mxu0
        %v502 = vadd.f32 0.0, %v501
        %v503 = vpop.f32.mrb[0].mxu0
        %v504 = vpop.f32.mrb[0].mxu0
        %v505 = vpop.f32.mrb[0].mxu0
        %506 = vdwg.mxu0
        %v507 = vpack.c.bf16 %v502, %v502
        %v509 = vsel %vm287, %v507, 0
        %v512 = vsel %vm351, %v281, 0
        %514 = vmatprep.subr.bf16.mxu0 0
        %515 = vmatpush1.bf16.msra.mxu0 %v512
        %516 = vmatprep.subr.bf16.mxu0 0
        %517 = vmatpush1.bf16.msra.mxu0 0
        %518 = vmatprep.subr.bf16.mxu0 0
        %519 = vmatpush1.bf16.msra.mxu0 0
        %520 = vmatprep.subr.bf16.mxu0 0
        %521 = vmatpush1.bf16.msra.mxu0 0
        %522 = vmatprep.subr.bf16.mxu0 0
        %523 = vmatpush1.bf16.msra.mxu0 0
        %524 = vmatprep.subr.bf16.mxu0 0
        %525 = vmatpush1.bf16.msra.mxu0 0
        %526 = vmatprep.subr.bf16.mxu0 0
        %527 = vmatpush1.bf16.msra.mxu0 0
        %528 = vmatprep.subr.bf16.mxu0 0
        %529 = vmatpush1.bf16.msra.mxu0 0
        %530 = vmatprep.subr.bf16.mxu0 0
        %531 = vmatpush1.bf16.msra.mxu0 0
        %532 = vmatprep.subr.bf16.mxu0 0
        %533 = vmatpush1.bf16.msra.mxu0 0
        %534 = vmatprep.subr.bf16.mxu0 0
        %535 = vmatpush1.bf16.msra.mxu0 0
        %536 = vmatprep.subr.bf16.mxu0 0
        %537 = vmatpush1.bf16.msra.mxu0 0
        %538 = vmatprep.subr.bf16.mxu0 0
        %539 = vmatpush1.bf16.msra.mxu0 0
        %540 = vmatprep.subr.bf16.mxu0 0
        %541 = vmatpush1.bf16.msra.mxu0 0
        %542 = vmatprep.subr.bf16.mxu0 0
        %543 = vmatpush1.bf16.msra.mxu0 0
        %544 = vmatprep.subr.bf16.mxu0 0
        %545 = vmatpush1.bf16.msra.mxu0 0
        %546 = vmatprep.mubr.bf16.mxu0 0
        %547 = vmatmul.mubr.bf16.gmra.mrb[0].mxu0 %v509
        %v548 = vpop.f32.mrb[0].mxu0
        %v549 = vadd.f32 0.0, %v548
        %v550 = vpop.f32.mrb[0].mxu0
        %v551 = vpop.f32.mrb[0].mxu0
        %v552 = vpop.f32.mrb[0].mxu0
        %553 = vdwg.mxu0
        %v555 = vsel %vm287, %v395, 0
        %v558 = vsel %vm351, %v280, 0
        %560 = vmatprep.subr.bf16.mxu0 0
        %561 = vmatpush1.bf16.msra.mxu0 %v558
        %562 = vmatprep.subr.bf16.mxu0 0
        %563 = vmatpush1.bf16.msra.mxu0 0
        %564 = vmatprep.subr.bf16.mxu0 0
        %565 = vmatpush1.bf16.msra.mxu0 0
        %566 = vmatprep.subr.bf16.mxu0 0
        %567 = vmatpush1.bf16.msra.mxu0 0
        %568 = vmatprep.subr.bf16.mxu0 0
        %569 = vmatpush1.bf16.msra.mxu0 0
        %570 = vmatprep.subr.bf16.mxu0 0
        %571 = vmatpush1.bf16.msra.mxu0 0
        %572 = vmatprep.subr.bf16.mxu0 0
        %573 = vmatpush1.bf16.msra.mxu0 0
        %574 = vmatprep.subr.bf16.mxu0 0
        %575 = vmatpush1.bf16.msra.mxu0 0
        %576 = vmatprep.subr.bf16.mxu0 0
        %577 = vmatpush1.bf16.msra.mxu0 0
        %578 = vmatprep.subr.bf16.mxu0 0
        %579 = vmatpush1.bf16.msra.mxu0 0
        %580 = vmatprep.subr.bf16.mxu0 0
        %581 = vmatpush1.bf16.msra.mxu0 0
        %582 = vmatprep.subr.bf16.mxu0 0
        %583 = vmatpush1.bf16.msra.mxu0 0
        %584 = vmatprep.subr.bf16.mxu0 0
        %585 = vmatpush1.bf16.msra.mxu0 0
        %586 = vmatprep.subr.bf16.mxu0 0
        %587 = vmatpush1.bf16.msra.mxu0 0
        %588 = vmatprep.subr.bf16.mxu0 0
        %589 = vmatpush1.bf16.msra.mxu0 0
        %590 = vmatprep.subr.bf16.mxu0 0
        %591 = vmatpush1.bf16.msra.mxu0 0
        %592 = vmatprep.mubr.bf16.mxu0 0
        %593 = vmatmul.mubr.bf16.gmra.mrb[0].mxu0 %v555
        %v594 = vpop.f32.mrb[0].mxu0
        %v595 = vadd.f32 %v549, %v594
        %v596 = vpop.f32.mrb[0].mxu0
        %v597 = vpop.f32.mrb[0].mxu0
        %v598 = vpop.f32.mrb[0].mxu0
        %599 = vdwg.mxu0
        %600 = vrot.lane.b32.xlu0 %v278, 112
        %v601 = vpop.permute.xlu0 %600
        %602 = vrot.lane.b32.xlu0 %v279, 80
        %v603 = vpop.permute.xlu0 %602
        %v605 = vsel %vm287, %v601, 0
        %v608 = vsel %vm287, %v603, 0
        %610 = vmatprep.subr.bf16.mxu0 0
        %611 = vmatpush1.bf16.xpose.msra.mxu0 %v608
        %612 = vmatprep.subr.bf16.mxu0 0
        %613 = vmatpush1.bf16.xpose.msra.mxu0 0
        %614 = vmatprep.subr.bf16.mxu0 0
        %615 = vmatpush1.bf16.xpose.msra.mxu0 0
        %616 = vmatprep.subr.bf16.mxu0 0
        %617 = vmatpush1.bf16.xpose.msra.mxu0 0
        %618 = vmatprep.subr.bf16.mxu0 0
        %619 = vmatpush1.bf16.xpose.msra.mxu0 0
        %620 = vmatprep.subr.bf16.mxu0 0
        %621 = vmatpush1.bf16.xpose.msra.mxu0 0
        %622 = vmatprep.subr.bf16.mxu0 0
        %623 = vmatpush1.bf16.xpose.msra.mxu0 0
        %624 = vmatprep.subr.bf16.mxu0 0
        %625 = vmatpush1.bf16.xpose.msra.mxu0 0
        %626 = vmatprep.subr.bf16.mxu0 0
        %627 = vmatpush1.bf16.xpose.msra.mxu0 0
        %628 = vmatprep.subr.bf16.mxu0 0
        %629 = vmatpush1.bf16.xpose.msra.mxu0 0
        %630 = vmatprep.subr.bf16.mxu0 0
        %631 = vmatpush1.bf16.xpose.msra.mxu0 0
        %632 = vmatprep.subr.bf16.mxu0 0
        %633 = vmatpush1.bf16.xpose.msra.mxu0 0
        %634 = vmatprep.subr.bf16.mxu0 0
        %635 = vmatpush1.bf16.xpose.msra.mxu0 0
        %636 = vmatprep.subr.bf16.mxu0 0
        %637 = vmatpush1.bf16.xpose.msra.mxu0 0
        %638 = vmatprep.subr.bf16.mxu0 0
        %639 = vmatpush1.bf16.xpose.msra.mxu0 0
        %640 = vmatprep.subr.bf16.mxu0 0
        %641 = vmatpush1.bf16.xpose.msra.mxu0 0
        %642 = vmatprep.mubr.bf16.mxu0 0
        %643 = vmatmul.mubr.bf16.gmra.mrb[0].mxu0 %v605
        %v644 = vpop.f32.mrb[0].mxu0
        %v645 = vadd.f32 0.0, %v644
        %v646 = vpop.f32.mrb[0].mxu0
        %v647 = vpop.f32.mrb[0].mxu0
        %v648 = vpop.f32.mrb[0].mxu0
        %649 = vdwg.mxu0
        %v650 = vsel %vm287, %v645, -inf
        %651 = vmax.xlane.f32.xlu0 %v650
        %v652 = vpop.xlane.xlu0 %651
        %v653 = vsub.f32 %v645, %v652
        %v654 = vmul.f32 %v653, 1.442695
        %v655 = vpow.pop %v654
        %v656 = vsel %vm287, %v655, 0.0
        %657 = vadd.xlane.f32.xlu0 %v656
        %v658 = vpop.xlane.xlu0 %657
        %v659 = vrcp.pop %v658
        %v660 = vmul.f32 %v655, %v659
        %v661 = vpack.c.bf16 %v660, %v660
        %662 = vrot.lane.b32.xlu0 %v279, 48
        %v663 = vpop.permute.xlu0 %662
        %v665 = vsel %vm287, %v661, 0
        %v668 = vsel %vm351, %v663, 0
        %670 = vmatprep.subr.bf16.mxu0 0
        %671 = vmatpush1.bf16.msra.mxu0 %v668
        %672 = vmatprep.subr.bf16.mxu0 0
        %673 = vmatpush1.bf16.msra.mxu0 0
        %674 = vmatprep.subr.bf16.mxu0 0
        %675 = vmatpush1.bf16.msra.mxu0 0
        %676 = vmatprep.subr.bf16.mxu0 0
        %677 = vmatpush1.bf16.msra.mxu0 0
        %678 = vmatprep.subr.bf16.mxu0 0
        %679 = vmatpush1.bf16.msra.mxu0 0
        %680 = vmatprep.subr.bf16.mxu0 0
        %681 = vmatpush1.bf16.msra.mxu0 0
        %682 = vmatprep.subr.bf16.mxu0 0
        %683 = vmatpush1.bf16.msra.mxu0 0
        %684 = vmatprep.subr.bf16.mxu0 0
        %685 = vmatpush1.bf16.msra.mxu0 0
        %686 = vmatprep.subr.bf16.mxu0 0
        %687 = vmatpush1.bf16.msra.mxu0 0
        %688 = vmatprep.subr.bf16.mxu0 0
        %689 = vmatpush1.bf16.msra.mxu0 0
        %690 = vmatprep.subr.bf16.mxu0 0
        %691 = vmatpush1.bf16.msra.mxu0 0
        %692 = vmatprep.subr.bf16.mxu0 0
        %693 = vmatpush1.bf16.msra.mxu0 0
        %694 = vmatprep.subr.bf16.mxu0 0
        %695 = vmatpush1.bf16.msra.mxu0 0
        %696 = vmatprep.subr.bf16.mxu0 0
        %697 = vmatpush1.bf16.msra.mxu0 0
        %698 = vmatprep.subr.bf16.mxu0 0
        %699 = vmatpush1.bf16.msra.mxu0 0
        %700 = vmatprep.subr.bf16.mxu0 0
        %701 = vmatpush1.bf16.msra.mxu0 0
        %702 = vmatprep.mubr.bf16.mxu0 0
        %703 = vmatmul.mubr.bf16.gmra.mrb[0].mxu0 %v665
        %v704 = vpop.f32.mrb[0].mxu0
        %v705 = vadd.f32 0.0, %v704
        %v706 = vpop.f32.mrb[0].mxu0
        %v707 = vpop.f32.mrb[0].mxu0
        %v708 = vpop.f32.mrb[0].mxu0
        %709 = vdwg.mxu0
        %v710 = vpack.c.bf16 %v705, %v705
        %v712 = vsel %vm287, %v710, 0
        %v715 = vsel %vm351, %v282, 0
        %717 = vmatprep.subr.bf16.mxu0 0
        %718 = vmatpush1.bf16.msra.mxu0 %v715
        %719 = vmatprep.subr.bf16.mxu0 0
        %720 = vmatpush1.bf16.msra.mxu0 0
        %721 = vmatprep.subr.bf16.mxu0 0
        %722 = vmatpush1.bf16.msra.mxu0 0
        %723 = vmatprep.subr.bf16.mxu0 0
        %724 = vmatpush1.bf16.msra.mxu0 0
        %725 = vmatprep.subr.bf16.mxu0 0
        %726 = vmatpush1.bf16.msra.mxu0 0
        %727 = vmatprep.subr.bf16.mxu0 0
        %728 = vmatpush1.bf16.msra.mxu0 0
        %729 = vmatprep.subr.bf16.mxu0 0
        %730 = vmatpush1.bf16.msra.mxu0 0
        %731 = vmatprep.subr.bf16.mxu0 0
        %732 = vmatpush1.bf16.msra.mxu0 0
        %733 = vmatprep.subr.bf16.mxu0 0
        %734 = vmatpush1.bf16.msra.mxu0 0
        %735 = vmatprep.subr.bf16.mxu0 0
        %736 = vmatpush1.bf16.msra.mxu0 0
        %737 = vmatprep.subr.bf16.mxu0 0
        %738 = vmatpush1.bf16.msra.mxu0 0
        %739 = vmatprep.subr.bf16.mxu0 0
        %740 = vmatpush1.bf16.msra.mxu0 0
        %741 = vmatprep.subr.bf16.mxu0 0
        %742 = vmatpush1.bf16.msra.mxu0 0
        %743 = vmatprep.subr.bf16.mxu0 0
        %744 = vmatpush1.bf16.msra.mxu0 0
        %745 = vmatprep.subr.bf16.mxu0 0
        %746 = vmatpush1.bf16.msra.mxu0 0
        %747 = vmatprep.subr.bf16.mxu0 0
        %748 = vmatpush1.bf16.msra.mxu0 0
        %749 = vmatprep.mubr.bf16.mxu0 0
        %750 = vmatmul.mubr.bf16.gmra.mrb[0].mxu0 %v712
        %v751 = vpop.f32.mrb[0].mxu0
        %v752 = vadd.f32 0.0, %v751
        %v753 = vpop.f32.mrb[0].mxu0
        %v754 = vpop.f32.mrb[0].mxu0
        %v755 = vpop.f32.mrb[0].mxu0
        %756 = vdwg.mxu0
        %v757 = vadd.f32 %v595, %v752
        %758 = vrot.lane.b32.xlu0 %v278, 104
        %v759 = vpop.permute.xlu0 %758
        %760 = vrot.lane.b32.xlu0 %v279, 72
        %v761 = vpop.permute.xlu0 %760
        %v763 = vsel %vm287, %v759, 0
        %v766 = vsel %vm287, %v761, 0
        %768 = vmatprep.subr.bf16.mxu0 0
        %769 = vmatpush1.bf16.xpose.msra.mxu0 %v766
        %770 = vmatprep.subr.bf16.mxu0 0
        %771 = vmatpush1.bf16.xpose.msra.mxu0 0
        %772 = vmatprep.subr.bf16.mxu0 0
        %773 = vmatpush1.bf16.xpose.msra.mxu0 0
        %774 = vmatprep.subr.bf16.mxu0 0
        %775 = vmatpush1.bf16.xpose.msra.mxu0 0
        %776 = vmatprep.subr.bf16.mxu0 0
        %777 = vmatpush1.bf16.xpose.msra.mxu0 0
        %778 = vmatprep.subr.bf16.mxu0 0
        %779 = vmatpush1.bf16.xpose.msra.mxu0 0
        %780 = vmatprep.subr.bf16.mxu0 0
        %781 = vmatpush1.bf16.xpose.msra.mxu0 0
        %782 = vmatprep.subr.bf16.mxu0 0
        %783 = vmatpush1.bf16.xpose.msra.mxu0 0
        %784 = vmatprep.subr.bf16.mxu0 0
        %785 = vmatpush1.bf16.xpose.msra.mxu0 0
        %786 = vmatprep.subr.bf16.mxu0 0
        %787 = vmatpush1.bf16.xpose.msra.mxu0 0
        %788 = vmatprep.subr.bf16.mxu0 0
        %789 = vmatpush1.bf16.xpose.msra.mxu0 0
        %790 = vmatprep.subr.bf16.mxu0 0
        %791 = vmatpush1.bf16.xpose.msra.mxu0 0
        %792 = vmatprep.subr.bf16.mxu0 0
        %793 = vmatpush1.bf16.xpose.msra.mxu0 0
        %794 = vmatprep.subr.bf16.mxu0 0
        %795 = vmatpush1.bf16.xpose.msra.mxu0 0
        %796 = vmatprep.subr.bf16.mxu0 0
        %797 = vmatpush1.bf16.xpose.msra.mxu0 0
        %798 = vmatprep.subr.bf16.mxu0 0
        %799 = vmatpush1.bf16.xpose.msra.mxu0 0
        %800 = vmatprep.mubr.bf16.mxu0 0
        %801 = vmatmul.mubr.bf16.gmra.mrb[0].mxu0 %v763
        %v802 = vpop.f32.mrb[0].mxu0
        %v803 = vadd.f32 0.0, %v802
        %v804 = vpop.f32.mrb[0].mxu0
        %v805 = vpop.f32.mrb[0].mxu0
        %v806 = vpop.f32.mrb[0].mxu0
        %807 = vdwg.mxu0
        %v808 = vsel %vm287, %v803, -inf
        %809 = vmax.xlane.f32.xlu0 %v808
        %v810 = vpop.xlane.xlu0 %809
        %v811 = vsub.f32 %v803, %v810
        %v812 = vmul.f32 %v811, 1.442695
        %v813 = vpow.pop %v812
        %v814 = vsel %vm287, %v813, 0.0
        %815 = vadd.xlane.f32.xlu0 %v814
        %v816 = vpop.xlane.xlu0 %815
        %v817 = vrcp.pop %v816
        %v818 = vmul.f32 %v813, %v817
        %v819 = vpack.c.bf16 %v818, %v818
        %820 = vrot.lane.b32.xlu0 %v279, 40
        %v821 = vpop.permute.xlu0 %820
        %v823 = vsel %vm287, %v819, 0
        %v826 = vsel %vm351, %v821, 0
        %828 = vmatprep.subr.bf16.mxu0 0
        %829 = vmatpush1.bf16.msra.mxu0 %v826
        %830 = vmatprep.subr.bf16.mxu0 0
        %831 = vmatpush1.bf16.msra.mxu0 0
        %832 = vmatprep.subr.bf16.mxu0 0
        %833 = vmatpush1.bf16.msra.mxu0 0
        %834 = vmatprep.subr.bf16.mxu0 0
        %835 = vmatpush1.bf16.msra.mxu0 0
        %836 = vmatprep.subr.bf16.mxu0 0
        %837 = vmatpush1.bf16.msra.mxu0 0
        %838 = vmatprep.subr.bf16.mxu0 0
        %839 = vmatpush1.bf16.msra.mxu0 0
        %840 = vmatprep.subr.bf16.mxu0 0
        %841 = vmatpush1.bf16.msra.mxu0 0
        %842 = vmatprep.subr.bf16.mxu0 0
        %843 = vmatpush1.bf16.msra.mxu0 0
        %844 = vmatprep.subr.bf16.mxu0 0
        %845 = vmatpush1.bf16.msra.mxu0 0
        %846 = vmatprep.subr.bf16.mxu0 0
        %847 = vmatpush1.bf16.msra.mxu0 0
        %848 = vmatprep.subr.bf16.mxu0 0
        %849 = vmatpush1.bf16.msra.mxu0 0
        %850 = vmatprep.subr.bf16.mxu0 0
        %851 = vmatpush1.bf16.msra.mxu0 0
        %852 = vmatprep.subr.bf16.mxu0 0
        %853 = vmatpush1.bf16.msra.mxu0 0
        %854 = vmatprep.subr.bf16.mxu0 0
        %855 = vmatpush1.bf16.msra.mxu0 0
        %856 = vmatprep.subr.bf16.mxu0 0
        %857 = vmatpush1.bf16.msra.mxu0 0
        %858 = vmatprep.subr.bf16.mxu0 0
        %859 = vmatpush1.bf16.msra.mxu0 0
        %860 = vmatprep.mubr.bf16.mxu0 0
        %861 = vmatmul.mubr.bf16.gmra.mrb[0].mxu0 %v823
        %v862 = vpop.f32.mrb[0].mxu0
        %v863 = vadd.f32 0.0, %v862
        %v864 = vpop.f32.mrb[0].mxu0
        %v865 = vpop.f32.mrb[0].mxu0
        %v866 = vpop.f32.mrb[0].mxu0
        %867 = vdwg.mxu0
        %v868 = vpack.c.bf16 %v863, %v863
        %v870 = vsel %vm287, %v868, 0
        %v873 = vsel %vm351, %v283, 0
        %875 = vmatprep.subr.bf16.mxu0 0
        %876 = vmatpush1.bf16.msra.mxu0 %v873
        %877 = vmatprep.subr.bf16.mxu0 0
        %878 = vmatpush1.bf16.msra.mxu0 0
        %879 = vmatprep.subr.bf16.mxu0 0
        %880 = vmatpush1.bf16.msra.mxu0 0
        %881 = vmatprep.subr.bf16.mxu0 0
        %882 = vmatpush1.bf16.msra.mxu0 0
        %883 = vmatprep.subr.bf16.mxu0 0
        %884 = vmatpush1.bf16.msra.mxu0 0
        %885 = vmatprep.subr.bf16.mxu0 0
        %886 = vmatpush1.bf16.msra.mxu0 0
        %887 = vmatprep.subr.bf16.mxu0 0
        %888 = vmatpush1.bf16.msra.mxu0 0
        %889 = vmatprep.subr.bf16.mxu0 0
        %890 = vmatpush1.bf16.msra.mxu0 0
        %891 = vmatprep.subr.bf16.mxu0 0
        %892 = vmatpush1.bf16.msra.mxu0 0
        %893 = vmatprep.subr.bf16.mxu0 0
        %894 = vmatpush1.bf16.msra.mxu0 0
        %895 = vmatprep.subr.bf16.mxu0 0
        %896 = vmatpush1.bf16.msra.mxu0 0
        %897 = vmatprep.subr.bf16.mxu0 0
        %898 = vmatpush1.bf16.msra.mxu0 0
        %899 = vmatprep.subr.bf16.mxu0 0
        %900 = vmatpush1.bf16.msra.mxu0 0
        %901 = vmatprep.subr.bf16.mxu0 0
        %902 = vmatpush1.bf16.msra.mxu0 0
        %903 = vmatprep.subr.bf16.mxu0 0
        %904 = vmatpush1.bf16.msra.mxu0 0
        %905 = vmatprep.subr.bf16.mxu0 0
        %906 = vmatpush1.bf16.msra.mxu0 0
        %907 = vmatprep.mubr.bf16.mxu0 0
        %908 = vmatmul.mubr.bf16.gmra.mrb[0].mxu0 %v870
        %v909 = vpop.f32.mrb[0].mxu0
        %v910 = vadd.f32 0.0, %v909
        %v911 = vpop.f32.mrb[0].mxu0
        %v912 = vpop.f32.mrb[0].mxu0
        %v913 = vpop.f32.mrb[0].mxu0
        %914 = vdwg.mxu0
        %v915 = vadd.f32 %v757, %v910
        %916 = vst.msk [vmem:[%s214] sm:$0xff] %vm233, %v915
        %s917 = sand.u32 %s97, 1
        %s918 = scalar_lea.sflag [#allocation4], %s917
        %s919 = sand.u32 %s97, 1
        %s920 = smul.addr %s919, 8
        %s921 = scalar_lea.vmem [#allocation8], %s920
        // Predicated region
        $region45: #{tpu_custom_call.1} parent=31 // pred_check
          %p922 = pneg %p107
        $region46: #{tpu_custom_call.1} parent=31 // pred_check_branch
          %924 = sbr.rel (%p922) target = $region48
        $region47: #{tpu_custom_call.1} parent=31 // pred_region
          %s926 = ssub.s32 128, 128
          %927 = vsyncadd %s918, %s926
          %s928 = smul.addr %s21, 128
          %s929 = scalar_lea.hbm %s3, %s928
          %s931 = sshll.u32 %s921, 4
          %s932 = int_to_ptr.vmem [resolvable:$true] %s931
          %934 = dma.vmem_to_hbm [thread:$0]  %s932, 128, %s929, %s918
        $region48: #{tpu_custom_call.1} parent=31 // pred_fallthru
          _
      $region32: #{tpu_custom_call.1} parent=5 // pred_fallthru
        _
      %p935 = scmp.le.s32.totalorder 2, %s16
      // Predicated region
      $region49: #{tpu_custom_call.1} parent=5 // pred_check
        %p936 = pneg %p935
      $region50: #{tpu_custom_call.1} parent=5 // pred_check_branch
        %938 = sbr.rel (%p936) target = $region52
      $region51: #{tpu_custom_call.1} parent=5 // pred_region
        %s939 = ssub.s32 %s16, 2
        // Predicated region
        $region53: #{tpu_custom_call.1} parent=51 // pred_check
          %p940 = pneg %p113
        $region54: #{tpu_custom_call.1} parent=51 // pred_check_branch
          %942 = sbr.rel (%p940) target = $region56
        $region55: #{tpu_custom_call.1} parent=51 // pred_region
          %s943 = sand.u32 %s98, 1
          %s944 = scalar_lea.sflag [#allocation4], %s943
          %s945 = sand.u32 %s98, 1
          %s946 = smul.addr %s945, 8
          %s947 = scalar_lea.vmem [#allocation8], %s946
          %948 = dma.done %s944, 128
        $region56: #{tpu_custom_call.1} parent=51 // pred_fallthru
          _
      $region52: #{tpu_custom_call.1} parent=5 // pred_fallthru
        _
    $region6: #{tpu_custom_call.1} parent=1 // loop_footer
      %s20 = sadd.s32 1, %s16
    $region7: #{tpu_custom_call.1} parent=1 // loop_footer_branch
      %15 = sbr.rel target = $region3
    $region8: #{tpu_custom_call.1} parent=1 // loop_exit
      _
    %949 = vsyncpa [#allocation3], 1
    %s950 = scalar_lea.sflag [#allocation3], 1
    %951 = vsyncpa %s950, 1
    %952 = vsyncpa [#allocation6], 1
    %953 = vsyncpa [#allocation4], 1
    %s954 = scalar_lea.sflag [#allocation4], 1
    %955 = vsyncpa %s954, 1

</llo_original>
